<compile_context>
chip_gen: v6e
topology: v6e:2x2x1
jax: 0.10.0
libtpu: 0.0.40
codegen_flags: <defaults>
</compile_context>

<pallas_src>
import jax
import jax.numpy as jnp
from jax.experimental import pallas as pl
from jax.experimental.pallas import tpu as pltpu


P = 16           # input feature dim (p)
DIM = 32         # hidden_dim
CLASSES = 8      # number of output classes
MAX_BM = 4096    # max batch rows (lanes) per grid step


def _round_up(x, m):
    return (x + m - 1) // m * m


def _cdiv(a, b):
    return (a + b - 1) // b


def _pick_bm(b, max_bm):
    """Batch tile: one big tile if it fits, else even 128-multiple tiles."""
    b8 = _round_up(b, 8)
    if b8 <= max_bm:
        return b8                       # single grid step, block == full lane dim
    n_steps = _cdiv(b8, max_bm)
    return _round_up(_cdiv(b8, n_steps), 128)


def _bnn_kernel(xt_ref, w0_ref, w1h_ref, w1x_ref, w2h_ref, w2x_ref,
                b0_ref, b1_ref, b2_ref, out_ref):
    bf = jnp.bfloat16
    xt = xt_ref[...]                                   # (P, BM) bf16, lane-dense

    # Tiny transposed weights: cast f32 -> bf16 in-kernel (a handful of vregs).
    w0t = w0_ref[...].astype(bf)                       # (DIM, P)
    w1ht = w1h_ref[...].astype(bf)                     # (DIM, DIM)
    w1xt = w1x_ref[...].astype(bf)                     # (DIM, P)
    w2ht = w2h_ref[...].astype(bf)                     # (CLASSES, DIM)
    w2xt = w2x_ref[...].astype(bf)                     # (CLASSES, P)

    # layer 0: p -> dim, sigmoid via tanh (single EUP op).  z0 is (DIM, BM).
    z0 = jnp.dot(w0t, xt, preferred_element_type=jnp.float32) + b0_ref[...]
    h0 = 0.5 * (jnp.tanh(0.5 * z0) + 1.0)

    # layer 1: cat(h0, x) @ W1 + b1  ==  W1h^T @ h0^T + W1x^T @ x^T + b1
    z1 = (jnp.dot(w1ht, h0.astype(bf), preferred_element_type=jnp.float32)
          + jnp.dot(w1xt, xt, preferred_element_type=jnp.float32)
          + b1_ref[...])
    h1 = 0.5 * (jnp.tanh(0.5 * z1) + 1.0)

    # output layer: logits (CLASSES, BM), then log_softmax over the class
    # sublanes (8-wide cross-sublane reduce on dense vregs).
    logits = (jnp.dot(w2ht, h1.astype(bf), preferred_element_type=jnp.float32)
              + jnp.dot(w2xt, xt, preferred_element_type=jnp.float32)
              + b2_ref[...])
    m = jnp.max(logits, axis=0, keepdims=True)         # (1, BM)
    z = logits - m
    lse = jnp.log(jnp.sum(jnp.exp(z), axis=0, keepdims=True))
    out_ref[...] = (z - lse).astype(out_ref.dtype)     # (CLASSES, BM) lane-dense


def bayesian_network_forward(x, params, max_bm=MAX_BM):
    """x: (..., P). Returns log-probabilities (B, CLASSES), B = prod(leading dims)."""
    w0t, w1ht, w1xt, w2ht, w2xt, b0, b1, b2 = params

    xi = x.reshape(-1, P)
    b = xi.shape[0]
    bm = _pick_bm(b, max_bm)
    b_pad = _round_up(b, bm)

    # One fused XLA pass over x: pad + transpose + f32->bf16 cast.
    # Batch goes to lanes, features to sublanes -> dense tiles everywhere.
    xt = jnp.pad(xi, ((0, b_pad - b), (0, 0))).T.astype(jnp.bfloat16)   # (P, b_pad)

    grid = (b_pad // bm,)
    full2d = lambda arr: pl.BlockSpec(arr.shape, lambda i: (0, 0))

    flops = 2 * b_pad * (P * DIM + DIM * DIM + P * DIM + DIM * CLASSES + P * CLASSES)
    transcendentals = b_pad * (2 * DIM + CLASSES + 1)
    bytes_accessed = (xt.size * 2 + b_pad * CLASSES * 4
                      + 4 * sum(a.size for a in params))

    out_t = pl.pallas_call(
        _bnn_kernel,
        out_shape=jax.ShapeDtypeStruct((CLASSES, b_pad), jnp.float32),
        grid_spec=pltpu.PrefetchScalarGridSpec(
            num_scalar_prefetch=0,
            grid=grid,
            in_specs=[
                pl.BlockSpec((P, bm), lambda i: (0, i)),   # x^T tile (batch axis)
                full2d(w0t), full2d(w1ht), full2d(w1xt),   # transposed weights (f32)
                full2d(w2ht), full2d(w2xt),
                full2d(b0), full2d(b1), full2d(b2),        # biases as (rows, 1) f32
            ],
            out_specs=pl.BlockSpec((CLASSES, bm), lambda i: (0, i)),
        ),
        # NOTE: on v7x, pltpu.CORE_PARALLEL on this axis (with an even step
        # count) shards the batch across the two TensorCores; kept "parallel"
        # here so the kernel lowers cleanly on all generations.
        compiler_params=pltpu.CompilerParams(
            dimension_semantics=("parallel",)),
        cost_estimate=pl.CostEstimate(
            flops=flops, transcendentals=transcendentals,
            bytes_accessed=bytes_accessed),
    )(xt, w0t, w1ht, w1xt, w2ht, w2xt, b0, b1, b2)

    # (CLASSES, b_pad) -> (B, CLASSES): tiny slice+transpose (32 B/row).
    return out_t[:, :b].T


def pack_params(raw_params):
    """Repack PyTorch-layout mean weights into transposed f32 kernel params."""
    w0, b0, w1, b1, w2, b2 = raw_params          # weights stored (in, out) == torch W.T
    w1h, w1x = w1[:DIM], w1[DIM:]
    w2h, w2x = w2[:DIM], w2[DIM:]
    f32 = jnp.float32
    return (
        w0.T.astype(f32),                        # (DIM, P)
        w1h.T.astype(f32),                       # (DIM, DIM)
        w1x.T.astype(f32),                       # (DIM, P)
        w2h.T.astype(f32),                       # (CLASSES, DIM)
        w2x.T.astype(f32),                       # (CLASSES, P)
        b0.reshape(DIM, 1).astype(f32),
        b1.reshape(DIM, 1).astype(f32),
        b2.reshape(CLASSES, 1).astype(f32),
    )


def init_params(key):
    """Deterministic mean-weight init (weights stored as (in, out) == PyTorch W.T)."""
    ks = jax.random.split(key, 6)
    scale = 0.1
    w0 = scale * jax.random.normal(ks[0], (P, DIM), jnp.float32)
    b0 = scale * jax.random.normal(ks[1], (DIM,), jnp.float32)
    w1 = scale * jax.random.normal(ks[2], (DIM + P, DIM), jnp.float32)
    b1 = scale * jax.random.normal(ks[3], (DIM,), jnp.float32)
    w2 = scale * jax.random.normal(ks[4], (DIM + P, CLASSES), jnp.float32)
    b2 = scale * jax.random.normal(ks[5], (CLASSES,), jnp.float32)
    raw = (w0, b0, w1, b1, w2, b2)
    return pack_params(raw), raw


def reference_forward(x, raw_params):
    w0, b0, w1, b1, w2, b2 = raw_params
    xi = x.reshape(-1, P).astype(jnp.float32)
    h0 = jax.nn.sigmoid(xi @ w0 + b0)
    h1 = jax.nn.sigmoid(jnp.concatenate([h0, xi], axis=1) @ w1 + b1)
    logits = jnp.concatenate([h1, xi], axis=1) @ w2 + b2
    return jax.nn.log_softmax(logits, axis=1)


if __name__ == "__main__":
    key = jax.random.PRNGKey(0)
    k_x1, k_x2, k_p = jax.random.split(key, 3)

    params, raw_params = init_params(k_p)

    # Check 1: leading dims get flattened (view(-1, p) semantics), single-step grid.
    x1 = jax.random.normal(k_x1, (2, 128, P), jnp.float32)      # 256 rows total
    fwd = jax.jit(bayesian_network_forward, static_argnames=("max_bm",))
    out1 = jax.block_until_ready(fwd(x1, params))
    ref1 = reference_forward(x1, raw_params)
    assert out1.shape == (256, CLASSES)
    # bf16 matmul operands vs pure-f32 reference -> tolerance set accordingly.
    assert jnp.allclose(out1, ref1, atol=2e-2, rtol=2e-2), "mismatch vs JAX reference"
    assert jnp.allclose(jnp.sum(jnp.exp(out1), axis=1), 1.0, atol=1e-3), \
        "rows are not log-probs"

    # Check 2: multi-step grid + batch padding (B=300, 128-row tiles -> 3 steps).
    x2 = jax.random.normal(k_x2, (300, P), jnp.float32)
    out2 = jax.block_until_ready(bayesian_network_forward(x2, params, max_bm=128))
    ref2 = reference_forward(x2, raw_params)
    assert out2.shape == (300, CLASSES)
    assert jnp.allclose(out2, ref2, atol=2e-2, rtol=2e-2), "mismatch (multi-step grid)"

    print("KERNEL_OK")
</pallas_src>

<mosaic_0001>
module attributes {stable_mosaic.version = 11 : i64} {
  func.func @_bnn_kernel(%arg0: i32, %arg1: memref<16x256xbf16, #tpu.memory_space<vmem>>, %arg2: memref<32x16xf32, #tpu.memory_space<vmem>>, %arg3: memref<32x32xf32, #tpu.memory_space<vmem>>, %arg4: memref<32x16xf32, #tpu.memory_space<vmem>>, %arg5: memref<8x32xf32, #tpu.memory_space<vmem>>, %arg6: memref<8x16xf32, #tpu.memory_space<vmem>>, %arg7: memref<32x1xf32, #tpu.memory_space<vmem>>, %arg8: memref<32x1xf32, #tpu.memory_space<vmem>>, %arg9: memref<8x1xf32, #tpu.memory_space<vmem>>, %arg10: memref<8x256xf32, #tpu.memory_space<vmem>>) attributes {dimension_semantics = [#tpu.dimension_semantics<parallel>], iteration_bounds = array<i64: 1>, scalar_prefetch = 0 : i64, scratch_operands = 0 : i64, tpu.core_type = #tpu.core_type<tc>, window_params = [{transform_indices = @transform_0, window_bounds = array<i64: 16, 256>}, {pipeline_mode = #tpu.pipeline_mode<synchronous>, transform_indices = @transform_1, window_bounds = array<i64: 32, 16>}, {pipeline_mode = #tpu.pipeline_mode<synchronous>, transform_indices = @transform_2, window_bounds = array<i64: 32, 32>}, {pipeline_mode = #tpu.pipeline_mode<synchronous>, transform_indices = @transform_3, window_bounds = array<i64: 32, 16>}, {pipeline_mode = #tpu.pipeline_mode<synchronous>, transform_indices = @transform_4, window_bounds = array<i64: 8, 32>}, {pipeline_mode = #tpu.pipeline_mode<synchronous>, transform_indices = @transform_5, window_bounds = array<i64: 8, 16>}, {pipeline_mode = #tpu.pipeline_mode<synchronous>, transform_indices = @transform_6, window_bounds = array<i64: 32, 1>}, {pipeline_mode = #tpu.pipeline_mode<synchronous>, transform_indices = @transform_7, window_bounds = array<i64: 32, 1>}, {pipeline_mode = #tpu.pipeline_mode<synchronous>, transform_indices = @transform_8, window_bounds = array<i64: 8, 1>}, {transform_indices = @transform_9, window_bounds = array<i64: 8, 256>}]} {
    %c0 = arith.constant 0 : index
    %c0_0 = arith.constant 0 : index
    %0 = vector.load %arg1[%c0, %c0_0] : memref<16x256xbf16, #tpu.memory_space<vmem>>, vector<16x256xbf16>
    %c0_1 = arith.constant 0 : index
    %c0_2 = arith.constant 0 : index
    %1 = vector.load %arg2[%c0_1, %c0_2] : memref<32x16xf32, #tpu.memory_space<vmem>>, vector<32x16xf32>
    %2 = arith.truncf %1 : vector<32x16xf32> to vector<32x16xbf16>
    %c0_3 = arith.constant 0 : index
    %c0_4 = arith.constant 0 : index
    %3 = vector.load %arg3[%c0_3, %c0_4] : memref<32x32xf32, #tpu.memory_space<vmem>>, vector<32x32xf32>
    %4 = arith.truncf %3 : vector<32x32xf32> to vector<32x32xbf16>
    %c0_5 = arith.constant 0 : index
    %c0_6 = arith.constant 0 : index
    %5 = vector.load %arg4[%c0_5, %c0_6] : memref<32x16xf32, #tpu.memory_space<vmem>>, vector<32x16xf32>
    %6 = arith.truncf %5 : vector<32x16xf32> to vector<32x16xbf16>
    %c0_7 = arith.constant 0 : index
    %c0_8 = arith.constant 0 : index
    %7 = vector.load %arg5[%c0_7, %c0_8] : memref<8x32xf32, #tpu.memory_space<vmem>>, vector<8x32xf32>
    %8 = arith.truncf %7 : vector<8x32xf32> to vector<8x32xbf16>
    %c0_9 = arith.constant 0 : index
    %c0_10 = arith.constant 0 : index
    %9 = vector.load %arg6[%c0_9, %c0_10] : memref<8x16xf32, #tpu.memory_space<vmem>>, vector<8x16xf32>
    %10 = arith.truncf %9 : vector<8x16xf32> to vector<8x16xbf16>
    %cst = arith.constant dense<0.000000e+00> : vector<32x256xf32>
    %11 = tpu.matmul %2, %0, %cst {dimension_numbers = #tpu.dot_dimension_numbers<[1], [0], [0], [1], [0, 0, 1, 1], [], []>} : vector<32x16xbf16>, vector<16x256xbf16>, vector<32x256xf32> -> vector<32x256xf32>
    %c0_11 = arith.constant 0 : index
    %c0_12 = arith.constant 0 : index
    %12 = vector.load %arg7[%c0_11, %c0_12] : memref<32x1xf32, #tpu.memory_space<vmem>>, vector<32x1xf32>
    %13 = vector.broadcast %12 : vector<32x1xf32> to vector<32x256xf32>
    %14 = arith.addf %11, %13 : vector<32x256xf32>
    %cst_13 = arith.constant 5.000000e-01 : f32
    %15 = vector.broadcast %cst_13 : f32 to vector<32x256xf32>
    %16 = arith.mulf %15, %14 : vector<32x256xf32>
    %17 = math.tanh %16 : vector<32x256xf32>
    %cst_14 = arith.constant 1.000000e+00 : f32
    %18 = vector.broadcast %cst_14 : f32 to vector<32x256xf32>
    %19 = arith.addf %17, %18 : vector<32x256xf32>
    %cst_15 = arith.constant 5.000000e-01 : f32
    %20 = vector.broadcast %cst_15 : f32 to vector<32x256xf32>
    %21 = arith.mulf %20, %19 : vector<32x256xf32>
    %22 = arith.truncf %21 : vector<32x256xf32> to vector<32x256xbf16>
    %cst_16 = arith.constant dense<0.000000e+00> : vector<32x256xf32>
    %23 = tpu.matmul %4, %22, %cst_16 {dimension_numbers = #tpu.dot_dimension_numbers<[1], [0], [0], [1], [0, 0, 1, 1], [], []>} : vector<32x32xbf16>, vector<32x256xbf16>, vector<32x256xf32> -> vector<32x256xf32>
    %cst_17 = arith.constant dense<0.000000e+00> : vector<32x256xf32>
    %24 = tpu.matmul %6, %0, %cst_17 {dimension_numbers = #tpu.dot_dimension_numbers<[1], [0], [0], [1], [0, 0, 1, 1], [], []>} : vector<32x16xbf16>, vector<16x256xbf16>, vector<32x256xf32> -> vector<32x256xf32>
    %25 = arith.addf %23, %24 : vector<32x256xf32>
    %c0_18 = arith.constant 0 : index
    %c0_19 = arith.constant 0 : index
    %26 = vector.load %arg8[%c0_18, %c0_19] : memref<32x1xf32, #tpu.memory_space<vmem>>, vector<32x1xf32>
    %27 = vector.broadcast %26 : vector<32x1xf32> to vector<32x256xf32>
    %28 = arith.addf %25, %27 : vector<32x256xf32>
    %cst_20 = arith.constant 5.000000e-01 : f32
    %29 = vector.broadcast %cst_20 : f32 to vector<32x256xf32>
    %30 = arith.mulf %29, %28 : vector<32x256xf32>
    %31 = math.tanh %30 : vector<32x256xf32>
    %cst_21 = arith.constant 1.000000e+00 : f32
    %32 = vector.broadcast %cst_21 : f32 to vector<32x256xf32>
    %33 = arith.addf %31, %32 : vector<32x256xf32>
    %cst_22 = arith.constant 5.000000e-01 : f32
    %34 = vector.broadcast %cst_22 : f32 to vector<32x256xf32>
    %35 = arith.mulf %34, %33 : vector<32x256xf32>
    %36 = arith.truncf %35 : vector<32x256xf32> to vector<32x256xbf16>
    %cst_23 = arith.constant dense<0.000000e+00> : vector<8x256xf32>
    %37 = tpu.matmul %8, %36, %cst_23 {dimension_numbers = #tpu.dot_dimension_numbers<[1], [0], [0], [1], [0, 0, 1, 1], [], []>} : vector<8x32xbf16>, vector<32x256xbf16>, vector<8x256xf32> -> vector<8x256xf32>
    %cst_24 = arith.constant dense<0.000000e+00> : vector<8x256xf32>
    %38 = tpu.matmul %10, %0, %cst_24 {dimension_numbers = #tpu.dot_dimension_numbers<[1], [0], [0], [1], [0, 0, 1, 1], [], []>} : vector<8x16xbf16>, vector<16x256xbf16>, vector<8x256xf32> -> vector<8x256xf32>
    %39 = arith.addf %37, %38 : vector<8x256xf32>
    %c0_25 = arith.constant 0 : index
    %c0_26 = arith.constant 0 : index
    %40 = vector.load %arg9[%c0_25, %c0_26] : memref<8x1xf32, #tpu.memory_space<vmem>>, vector<8x1xf32>
    %41 = vector.broadcast %40 : vector<8x1xf32> to vector<8x256xf32>
    %42 = arith.addf %39, %41 : vector<8x256xf32>
    %cst_27 = arith.constant dense<0xFF800000> : vector<256xf32>
    %43 = vector.multi_reduction <maximumf>, %42, %cst_27 [0] : vector<8x256xf32> to vector<256xf32>
    %44 = vector.shape_cast %43 : vector<256xf32> to vector<1x256xf32>
    %45 = vector.broadcast %44 : vector<1x256xf32> to vector<8x256xf32>
    %46 = arith.subf %42, %45 : vector<8x256xf32>
    %47 = math.exp %46 : vector<8x256xf32>
    %cst_28 = arith.constant dense<0.000000e+00> : vector<256xf32>
    %48 = vector.multi_reduction <add>, %47, %cst_28 [0] : vector<8x256xf32> to vector<256xf32>
    %49 = vector.shape_cast %48 : vector<256xf32> to vector<1x256xf32>
    %50 = math.log %49 : vector<1x256xf32>
    %51 = vector.broadcast %50 : vector<1x256xf32> to vector<8x256xf32>
    %52 = arith.subf %46, %51 : vector<8x256xf32>
    %c0_29 = arith.constant 0 : index
    %c0_30 = arith.constant 0 : index
    %53 = vector.load %arg10[%c0_29, %c0_30] : memref<8x256xf32, #tpu.memory_space<vmem>>, vector<8x256xf32>
    tpu.vector_store %arg10[%c0_29, %c0_30], %52 {strides = array<i32>} : memref<8x256xf32, #tpu.memory_space<vmem>>, vector<8x256xf32>,
    return
  }
  func.func @transform_0(%arg0: i32) -> (i32, i32) {
    %c0_i32 = arith.constant 0 : i32
    %c0_i32_0 = arith.constant 0 : i32
    return %c0_i32, %arg0 : i32, i32
  }
  func.func @transform_1(%arg0: i32) -> (i32, i32) {
    %c0_i32 = arith.constant 0 : i32
    %c0_i32_0 = arith.constant 0 : i32
    %c0_i32_1 = arith.constant 0 : i32
    return %c0_i32, %c0_i32_0 : i32, i32
  }
  func.func @transform_2(%arg0: i32) -> (i32, i32) {
    %c0_i32 = arith.constant 0 : i32
    %c0_i32_0 = arith.constant 0 : i32
    %c0_i32_1 = arith.constant 0 : i32
    return %c0_i32, %c0_i32_0 : i32, i32
  }
  func.func @transform_3(%arg0: i32) -> (i32, i32) {
    %c0_i32 = arith.constant 0 : i32
    %c0_i32_0 = arith.constant 0 : i32
    %c0_i32_1 = arith.constant 0 : i32
    return %c0_i32, %c0_i32_0 : i32, i32
  }
  func.func @transform_4(%arg0: i32) -> (i32, i32) {
    %c0_i32 = arith.constant 0 : i32
    %c0_i32_0 = arith.constant 0 : i32
    %c0_i32_1 = arith.constant 0 : i32
    return %c0_i32, %c0_i32_0 : i32, i32
  }
  func.func @transform_5(%arg0: i32) -> (i32, i32) {
    %c0_i32 = arith.constant 0 : i32
    %c0_i32_0 = arith.constant 0 : i32
    %c0_i32_1 = arith.constant 0 : i32
    return %c0_i32, %c0_i32_0 : i32, i32
  }
  func.func @transform_6(%arg0: i32) -> (i32, i32) {
    %c0_i32 = arith.constant 0 : i32
    %c0_i32_0 = arith.constant 0 : i32
    %c0_i32_1 = arith.constant 0 : i32
    return %c0_i32, %c0_i32_0 : i32, i32
  }
  func.func @transform_7(%arg0: i32) -> (i32, i32) {
    %c0_i32 = arith.constant 0 : i32
    %c0_i32_0 = arith.constant 0 : i32
    %c0_i32_1 = arith.constant 0 : i32
    return %c0_i32, %c0_i32_0 : i32, i32
  }
  func.func @transform_8(%arg0: i32) -> (i32, i32) {
    %c0_i32 = arith.constant 0 : i32
    %c0_i32_0 = arith.constant 0 : i32
    %c0_i32_1 = arith.constant 0 : i32
    return %c0_i32, %c0_i32_0 : i32, i32
  }
  func.func @transform_9(%arg0: i32) -> (i32, i32) {
    %c0_i32 = arith.constant 0 : i32
    %c0_i32_0 = arith.constant 0 : i32
    return %c0_i32, %arg0 : i32, i32
  }
}

</mosaic_0001>

<llo_original>
// kernel: bayesian_network_forward.1
$region0: #{bayesian_network_forward.1}
  #allocation0 [shape = 'u32[]', space=smem, size = 0x4, offset = 0x4, fixed_abs, tag = 'smem constant byte address 0x4 - core index']
  #allocation1 [shape = 'u32[144,128]{1,0:T(1,128)}', space=vmem, size = 0x12000, scoped, tag = 'internal scratch']
  %s0 = inlined_call_operand.vmem [shape: bf16[16,256], index: 0, kind: input, shape index: {}]
  %s1 = inlined_call_operand.vmem [shape: f32[32,16], index: 1, kind: input, shape index: {}]
  %s2 = inlined_call_operand.vmem [shape: f32[32,32], index: 2, kind: input, shape index: {}]
  %s3 = inlined_call_operand.vmem [shape: f32[32,16], index: 3, kind: input, shape index: {}]
  %s4 = inlined_call_operand.vmem [shape: f32[8,32], index: 4, kind: input, shape index: {}]
  %s5 = inlined_call_operand.vmem [shape: f32[8,16], index: 5, kind: input, shape index: {}]
  %s6 = inlined_call_operand.vmem [shape: f32[32,1], index: 6, kind: input, shape index: {}]
  %s7 = inlined_call_operand.vmem [shape: f32[32,1], index: 7, kind: input, shape index: {}]
  %s8 = inlined_call_operand.vmem [shape: f32[8,1], index: 8, kind: input, shape index: {}]
  %s9 = inlined_call_operand.hbm [shape: f32[8,256], index: 9, kind: output, shape index: {}]
  %s10 = sld [smem:[#allocation0]]
  $region46: #{bayesian_network_forward.1} parent=0
    _
  %s12 = ssub.s32 1, %s10
  %s13 = scalar_select 0, %s12, %s10
  $region1: #{bayesian_network_forward.1} parent=0
    #allocation2 [shape = 'u8[8192]{0}', space=vmem, size = 0x2000, scoped, tag = 'output window, operand 0, single buffered']
    #allocation3 [shape = 's32[1]{0}', space=sflag, size = 0x4, scoped, tag = 'scoped memory for bayesian_network_forward.1']
    %14 = vsyncpa [#allocation3], 0
    // Predicated region
    $region2: #{bayesian_network_forward.1} parent=1 // pred_check
      _
    $region3: #{bayesian_network_forward.1} parent=1 // pred_check_branch
      %16 = sbr.rel (0) target = $region5
    $region4: #{bayesian_network_forward.1} parent=1 // pred_region
      _
    $region5: #{bayesian_network_forward.1} parent=1 // pred_fallthru
      _
    // Predicated region
    $region6: #{bayesian_network_forward.1} parent=1 // pred_check
      _
    $region7: #{bayesian_network_forward.1} parent=1 // pred_check_branch
      %18 = sbr.rel (0) target = $region9
    $region8: #{bayesian_network_forward.1} parent=1 // pred_region
      _
    $region9: #{bayesian_network_forward.1} parent=1 // pred_fallthru
      _
    // Predicated region
    $region10: #{bayesian_network_forward.1} parent=1 // pred_check
      _
    $region11: #{bayesian_network_forward.1} parent=1 // pred_check_branch
      %20 = sbr.rel (0) target = $region13
    $region12: #{bayesian_network_forward.1} parent=1 // pred_region
      _
    $region13: #{bayesian_network_forward.1} parent=1 // pred_fallthru
      _
    // Predicated region
    $region14: #{bayesian_network_forward.1} parent=1 // pred_check
      _
    $region15: #{bayesian_network_forward.1} parent=1 // pred_check_branch
      %22 = sbr.rel (0) target = $region17
    $region16: #{bayesian_network_forward.1} parent=1 // pred_region
      _
    $region17: #{bayesian_network_forward.1} parent=1 // pred_fallthru
      _
    // Predicated region
    $region18: #{bayesian_network_forward.1} parent=1 // pred_check
      _
    $region19: #{bayesian_network_forward.1} parent=1 // pred_check_branch
      %24 = sbr.rel (0) target = $region21
    $region20: #{bayesian_network_forward.1} parent=1 // pred_region
      _
    $region21: #{bayesian_network_forward.1} parent=1 // pred_fallthru
      _
    // Predicated region
    $region22: #{bayesian_network_forward.1} parent=1 // pred_check
      _
    $region23: #{bayesian_network_forward.1} parent=1 // pred_check_branch
      %26 = sbr.rel (0) target = $region25
    $region24: #{bayesian_network_forward.1} parent=1 // pred_region
      _
    $region25: #{bayesian_network_forward.1} parent=1 // pred_fallthru
      _
    // Predicated region
    $region26: #{bayesian_network_forward.1} parent=1 // pred_check
      _
    $region27: #{bayesian_network_forward.1} parent=1 // pred_check_branch
      %28 = sbr.rel (0) target = $region29
    $region28: #{bayesian_network_forward.1} parent=1 // pred_region
      _
    $region29: #{bayesian_network_forward.1} parent=1 // pred_fallthru
      _
    // Predicated region
    $region30: #{bayesian_network_forward.1} parent=1 // pred_check
      _
    $region31: #{bayesian_network_forward.1} parent=1 // pred_check_branch
      %30 = sbr.rel (0) target = $region33
    $region32: #{bayesian_network_forward.1} parent=1 // pred_region
      _
    $region33: #{bayesian_network_forward.1} parent=1 // pred_fallthru
      _
    // Predicated region
    $region34: #{bayesian_network_forward.1} parent=1 // pred_check
      _
    $region35: #{bayesian_network_forward.1} parent=1 // pred_check_branch
      %32 = sbr.rel (0) target = $region37
    $region36: #{bayesian_network_forward.1} parent=1 // pred_region
      _
    $region37: #{bayesian_network_forward.1} parent=1 // pred_fallthru
      _
    %v34 = vld [vmem:[%s0] sm:$0xff]
    %v35 = vld [vmem:[%s0 + $0x8] sm:$0xff]
    %v36 = vld [vmem:[%s1] sm:$0xff]
    %v37 = vld [vmem:[%s1 + $0x8] sm:$0xff]
    %v38 = vld [vmem:[%s1 + $0x10] sm:$0xff]
    %v39 = vld [vmem:[%s1 + $0x18] sm:$0xff]
    %v40 = vpack.c.bf16 %v37, %v36
    %v41 = vpack.c.bf16 %v39, %v38
    %v42 = vld [vmem:[%s2] sm:$0xff]
    %v43 = vld [vmem:[%s2 + $0x8] sm:$0xff]
    %v44 = vld [vmem:[%s2 + $0x10] sm:$0xff]
    %v45 = vld [vmem:[%s2 + $0x18] sm:$0xff]
    %v46 = vpack.c.bf16 %v43, %v42
    %v47 = vpack.c.bf16 %v45, %v44
    %v48 = vld [vmem:[%s3] sm:$0xff]
    %v49 = vld [vmem:[%s3 + $0x8] sm:$0xff]
    %v50 = vld [vmem:[%s3 + $0x10] sm:$0xff]
    %v51 = vld [vmem:[%s3 + $0x18] sm:$0xff]
    %v52 = vpack.c.bf16 %v49, %v48
    %v53 = vpack.c.bf16 %v51, %v50
    %v54 = vld [vmem:[%s4] sm:$0xff]
    %v55 = vpack.c.bf16 %v54, %v54
    %v56 = vld [vmem:[%s5] sm:$0xff]
    %v57 = vpack.c.bf16 %v56, %v56
    %v58 = vld [vmem:[%s6] sm:$0xff]
    %v59 = vld [vmem:[%s6 + $0x8] sm:$0xff]
    %v60 = vld [vmem:[%s6 + $0x10] sm:$0xff]
    %v61 = vld [vmem:[%s6 + $0x18] sm:$0xff]
    %63 = vset.pattern.permute.xlu0 0
    %64 = vperm.xlu0 %63, %v58
    %v65 = vpop.permute.xlu0 %64
    %68 = vset.pattern.permute.xlu0 0
    %69 = vperm.xlu0 %68, %v59
    %v70 = vpop.permute.xlu0 %69
    %73 = vset.pattern.permute.xlu0 0
    %74 = vperm.xlu0 %73, %v60
    %v75 = vpop.permute.xlu0 %74
    %78 = vset.pattern.permute.xlu0 0
    %79 = vperm.xlu0 %78, %v61
    %v80 = vpop.permute.xlu0 %79
    %v84 = vunpack.c.l.b16 %v34
    %v85 = vunpack.c.h.b16 %v34
    %v86 = vunpack.c.l.b16 %v35
    %v87 = vunpack.c.h.b16 %v35
    %v88 = vpack.c.b16 %v86, %v84
    %v89 = vpack.c.b16 %v87, %v85
    %vm92 = vcmask 130048
    %v94 = vsel %vm92, %v40, 0
    %v97 = vsel %vm92, %v41, 0
    %99 = vmatprep.subr.bf16.mxu0 0
    %100 = vmatpush1.bf16.msra.mxu0 0
    %101 = vmatprep.subr.bf16.mxu0 0
    %102 = vmatpush1.bf16.msra.mxu0 0
    %103 = vmatprep.subr.bf16.mxu0 0
    %104 = vmatpush1.bf16.msra.mxu0 0
    %105 = vmatprep.subr.bf16.mxu0 0
    %106 = vmatpush1.bf16.msra.mxu0 0
    %107 = vmatprep.subr.bf16.mxu0 0
    %108 = vmatpush1.bf16.msra.mxu0 0
    %109 = vmatprep.subr.bf16.mxu0 0
    %110 = vmatpush1.bf16.msra.mxu0 0
    %111 = vmatprep.subr.bf16.mxu0 0
    %112 = vmatpush1.bf16.msra.mxu0 0
    %113 = vmatprep.subr.bf16.mxu0 %v89
    %114 = vmatpush1.bf16.msra.mxu0 %v88
    %115 = vmatprep.subr.bf16.mxu0 0
    %116 = vmatpush2.bf16.msra.mxu0 0
    %117 = vmatprep.subr.bf16.mxu0 0
    %118 = vmatpush2.bf16.msra.mxu0 0
    %119 = vmatprep.subr.bf16.mxu0 0
    %120 = vmatpush2.bf16.msra.mxu0 0
    %121 = vmatprep.subr.bf16.mxu0 0
    %122 = vmatpush2.bf16.msra.mxu0 0
    %123 = vmatprep.subr.bf16.mxu0 0
    %124 = vmatpush2.bf16.msra.mxu0 0
    %125 = vmatprep.subr.bf16.mxu0 0
    %126 = vmatpush2.bf16.msra.mxu0 0
    %127 = vmatprep.subr.bf16.mxu0 0
    %128 = vmatpush2.bf16.msra.mxu0 0
    %129 = vmatprep.subr.bf16.mxu0 0
    %130 = vmatpush2.bf16.msra.mxu0 0
    %131 = vmatprep.mubr.bf16.mxu0 0
    %132 = vmatmul.mubr.bf16.gmra.mxu0 %v94
    %v133 = vpop.f32.mrf.mxu0
    %v134 = vadd.f32 %v65, %v133
    %v135 = vpop.f32.mrf.mxu0
    %v136 = vadd.f32 %v65, %v135
    %v137 = vpop.f32.mrf.mxu0
    %v138 = vadd.f32 %v70, %v137
    %v139 = vpop.f32.mrf.mxu0
    %v140 = vadd.f32 %v70, %v139
    %141 = vmatprep.mubr.bf16.mxu0 0
    %142 = vmatmul.mubr.bf16.gmra.mxu0 %v97
    %v143 = vpop.f32.mrf.mxu0
    %v144 = vadd.f32 %v75, %v143
    %v145 = vpop.f32.mrf.mxu0
    %v146 = vadd.f32 %v75, %v145
    %v147 = vpop.f32.mrf.mxu0
    %v148 = vadd.f32 %v80, %v147
    %v149 = vpop.f32.mrf.mxu0
    %v150 = vadd.f32 %v80, %v149
    %151 = vdwg.mxu0
    %v152 = vmul.f32 %v134, 0.5
    %v153 = vmul.f32 %v136, 0.5
    %v154 = vmul.f32 %v138, 0.5
    %v155 = vmul.f32 %v140, 0.5
    %v156 = vmul.f32 %v144, 0.5
    %v157 = vmul.f32 %v146, 0.5
    %v158 = vmul.f32 %v148, 0.5
    %v159 = vmul.f32 %v150, 0.5
    %v160 = vtanh.pop %v152
    %v161 = vtanh.pop %v153
    %v162 = vtanh.pop %v154
    %v163 = vtanh.pop %v155
    %v164 = vtanh.pop %v156
    %v165 = vtanh.pop %v157
    %v166 = vtanh.pop %v158
    %v167 = vtanh.pop %v159
    %v168 = vadd.f32 %v160, 1.0
    %v169 = vadd.f32 %v161, 1.0
    %v170 = vadd.f32 %v162, 1.0
    %v171 = vadd.f32 %v163, 1.0
    %v172 = vadd.f32 %v164, 1.0
    %v173 = vadd.f32 %v165, 1.0
    %v174 = vadd.f32 %v166, 1.0
    %v175 = vadd.f32 %v167, 1.0
    %v176 = vmul.f32 %v168, 0.5
    %v177 = vmul.f32 %v169, 0.5
    %v178 = vmul.f32 %v170, 0.5
    %v179 = vmul.f32 %v171, 0.5
    %v180 = vmul.f32 %v172, 0.5
    %v181 = vmul.f32 %v173, 0.5
    %v182 = vmul.f32 %v174, 0.5
    %v183 = vmul.f32 %v175, 0.5
    %v184 = vpack.c.bf16 %v178, %v176
    %v185 = vpack.c.bf16 %v179, %v177
    %v186 = vpack.c.bf16 %v182, %v180
    %v187 = vpack.c.bf16 %v183, %v181
    %v189 = vsel %vm92, %v52, 0
    %v192 = vsel %vm92, %v53, 0
    %194 = vmatprep.subr.bf16.mxu0 0
    %195 = vmatpush1.bf16.msra.mxu0 0
    %196 = vmatprep.subr.bf16.mxu0 0
    %197 = vmatpush1.bf16.msra.mxu0 0
    %198 = vmatprep.subr.bf16.mxu0 0
    %199 = vmatpush1.bf16.msra.mxu0 0
    %200 = vmatprep.subr.bf16.mxu0 0
    %201 = vmatpush1.bf16.msra.mxu0 0
    %202 = vmatprep.subr.bf16.mxu0 0
    %203 = vmatpush1.bf16.msra.mxu0 0
    %204 = vmatprep.subr.bf16.mxu0 0
    %205 = vmatpush1.bf16.msra.mxu0 0
    %206 = vmatprep.subr.bf16.mxu0 0
    %207 = vmatpush1.bf16.msra.mxu0 0
    %208 = vmatprep.subr.bf16.mxu0 %v89
    %209 = vmatpush1.bf16.msra.mxu0 %v88
    %210 = vmatprep.subr.bf16.mxu0 0
    %211 = vmatpush2.bf16.msra.mxu0 0
    %212 = vmatprep.subr.bf16.mxu0 0
    %213 = vmatpush2.bf16.msra.mxu0 0
    %214 = vmatprep.subr.bf16.mxu0 0
    %215 = vmatpush2.bf16.msra.mxu0 0
    %216 = vmatprep.subr.bf16.mxu0 0
    %217 = vmatpush2.bf16.msra.mxu0 0
    %218 = vmatprep.subr.bf16.mxu0 0
    %219 = vmatpush2.bf16.msra.mxu0 0
    %220 = vmatprep.subr.bf16.mxu0 0
    %221 = vmatpush2.bf16.msra.mxu0 0
    %222 = vmatprep.subr.bf16.mxu0 0
    %223 = vmatpush2.bf16.msra.mxu0 0
    %224 = vmatprep.subr.bf16.mxu0 0
    %225 = vmatpush2.bf16.msra.mxu0 0
    %226 = vmatprep.mubr.bf16.mxu0 0
    %227 = vmatmul.mubr.bf16.gmra.mxu0 %v189
    %v228 = vpop.f32.mrf.mxu0
    %v229 = vadd.f32 0.0, %v228
    %v230 = vpop.f32.mrf.mxu0
    %v231 = vadd.f32 0.0, %v230
    %v232 = vpop.f32.mrf.mxu0
    %v233 = vadd.f32 0.0, %v232
    %v234 = vpop.f32.mrf.mxu0
    %v235 = vadd.f32 0.0, %v234
    %236 = vmatprep.mubr.bf16.mxu0 0
    %237 = vmatmul.mubr.bf16.gmra.mxu0 %v192
    %v238 = vpop.f32.mrf.mxu0
    %v239 = vadd.f32 0.0, %v238
    %v240 = vpop.f32.mrf.mxu0
    %v241 = vadd.f32 0.0, %v240
    %v242 = vpop.f32.mrf.mxu0
    %v243 = vadd.f32 0.0, %v242
    %v244 = vpop.f32.mrf.mxu0
    %v245 = vadd.f32 0.0, %v244
    %246 = vdwg.mxu0
    %vm247 = vcmask 261120
    %v249 = vsel %vm247, %v46, 0
    %v252 = vsel %vm247, %v47, 0
    %254 = vmatprep.subr.bf16.mxu0 0
    %255 = vmatpush1.bf16.msra.mxu0 0
    %256 = vmatprep.subr.bf16.mxu0 0
    %257 = vmatpush1.bf16.msra.mxu0 0
    %258 = vmatprep.subr.bf16.mxu0 0
    %259 = vmatpush1.bf16.msra.mxu0 0
    %260 = vmatprep.subr.bf16.mxu0 0
    %261 = vmatpush1.bf16.msra.mxu0 0
    %262 = vmatprep.subr.bf16.mxu0 0
    %263 = vmatpush1.bf16.msra.mxu0 0
    %264 = vmatprep.subr.bf16.mxu0 0
    %265 = vmatpush1.bf16.msra.mxu0 0
    %266 = vmatprep.subr.bf16.mxu0 %v187
    %267 = vmatpush1.bf16.msra.mxu0 %v186
    %268 = vmatprep.subr.bf16.mxu0 %v185
    %269 = vmatpush1.bf16.msra.mxu0 %v184
    %270 = vmatprep.subr.bf16.mxu0 0
    %271 = vmatpush2.bf16.msra.mxu0 0
    %272 = vmatprep.subr.bf16.mxu0 0
    %273 = vmatpush2.bf16.msra.mxu0 0
    %274 = vmatprep.subr.bf16.mxu0 0
    %275 = vmatpush2.bf16.msra.mxu0 0
    %276 = vmatprep.subr.bf16.mxu0 0
    %277 = vmatpush2.bf16.msra.mxu0 0
    %278 = vmatprep.subr.bf16.mxu0 0
    %279 = vmatpush2.bf16.msra.mxu0 0
    %280 = vmatprep.subr.bf16.mxu0 0
    %281 = vmatpush2.bf16.msra.mxu0 0
    %282 = vmatprep.subr.bf16.mxu0 0
    %283 = vmatpush2.bf16.msra.mxu0 0
    %284 = vmatprep.subr.bf16.mxu0 0
    %285 = vmatpush2.bf16.msra.mxu0 0
    %286 = vmatprep.mubr.bf16.mxu0 0
    %287 = vmatmul.mubr.bf16.gmra.mxu0 %v249
    %v288 = vpop.f32.mrf.mxu0
    %v289 = vadd.f32 %v229, %v288
    %v290 = vpop.f32.mrf.mxu0
    %v291 = vadd.f32 %v231, %v290
    %v292 = vpop.f32.mrf.mxu0
    %v293 = vadd.f32 %v233, %v292
    %v294 = vpop.f32.mrf.mxu0
    %v295 = vadd.f32 %v235, %v294
    %296 = vmatprep.mubr.bf16.mxu0 0
    %297 = vmatmul.mubr.bf16.gmra.mxu0 %v252
    %v298 = vpop.f32.mrf.mxu0
    %v299 = vadd.f32 %v239, %v298
    %v300 = vpop.f32.mrf.mxu0
    %v301 = vadd.f32 %v241, %v300
    %v302 = vpop.f32.mrf.mxu0
    %v303 = vadd.f32 %v243, %v302
    %v304 = vpop.f32.mrf.mxu0
    %v305 = vadd.f32 %v245, %v304
    %306 = vdwg.mxu0
    %v307 = vld [vmem:[%s7] sm:$0xff]
    %v308 = vld [vmem:[%s7 + $0x8] sm:$0xff]
    %v309 = vld [vmem:[%s7 + $0x10] sm:$0xff]
    %v310 = vld [vmem:[%s7 + $0x18] sm:$0xff]
    %312 = vset.pattern.permute.xlu0 0
    %313 = vperm.xlu0 %312, %v307
    %v314 = vpop.permute.xlu0 %313
    %317 = vset.pattern.permute.xlu0 0
    %318 = vperm.xlu0 %317, %v308
    %v319 = vpop.permute.xlu0 %318
    %322 = vset.pattern.permute.xlu0 0
    %323 = vperm.xlu0 %322, %v309
    %v324 = vpop.permute.xlu0 %323
    %327 = vset.pattern.permute.xlu0 0
    %328 = vperm.xlu0 %327, %v310
    %v329 = vpop.permute.xlu0 %328
    %v331 = vadd.f32 %v289, %v314
    %v332 = vadd.f32 %v291, %v314
    %v333 = vadd.f32 %v293, %v319
    %v334 = vadd.f32 %v295, %v319
    %v335 = vadd.f32 %v299, %v324
    %v336 = vadd.f32 %v301, %v324
    %v337 = vadd.f32 %v303, %v329
    %v338 = vadd.f32 %v305, %v329
    %v339 = vmul.f32 %v331, 0.5
    %v340 = vmul.f32 %v332, 0.5
    %v341 = vmul.f32 %v333, 0.5
    %v342 = vmul.f32 %v334, 0.5
    %v343 = vmul.f32 %v335, 0.5
    %v344 = vmul.f32 %v336, 0.5
    %v345 = vmul.f32 %v337, 0.5
    %v346 = vmul.f32 %v338, 0.5
    %v347 = vtanh.pop %v339
    %v348 = vtanh.pop %v340
    %v349 = vtanh.pop %v341
    %v350 = vtanh.pop %v342
    %v351 = vtanh.pop %v343
    %v352 = vtanh.pop %v344
    %v353 = vtanh.pop %v345
    %v354 = vtanh.pop %v346
    %v355 = vadd.f32 %v347, 1.0
    %v356 = vadd.f32 %v348, 1.0
    %v357 = vadd.f32 %v349, 1.0
    %v358 = vadd.f32 %v350, 1.0
    %v359 = vadd.f32 %v351, 1.0
    %v360 = vadd.f32 %v352, 1.0
    %v361 = vadd.f32 %v353, 1.0
    %v362 = vadd.f32 %v354, 1.0
    %v363 = vmul.f32 %v355, 0.5
    %v364 = vmul.f32 %v356, 0.5
    %v365 = vmul.f32 %v357, 0.5
    %v366 = vmul.f32 %v358, 0.5
    %v367 = vmul.f32 %v359, 0.5
    %v368 = vmul.f32 %v360, 0.5
    %v369 = vmul.f32 %v361, 0.5
    %v370 = vmul.f32 %v362, 0.5
    %v371 = vpack.c.bf16 %v365, %v363
    %v372 = vpack.c.bf16 %v366, %v364
    %v373 = vpack.c.bf16 %v369, %v367
    %v374 = vpack.c.bf16 %v370, %v368
    %v376 = vsel %vm92, %v57, 0
    %378 = vmatprep.subr.bf16.mxu0 0
    %379 = vmatpush1.bf16.msra.mxu0 0
    %380 = vmatprep.subr.bf16.mxu0 0
    %381 = vmatpush1.bf16.msra.mxu0 0
    %382 = vmatprep.subr.bf16.mxu0 0
    %383 = vmatpush1.bf16.msra.mxu0 0
    %384 = vmatprep.subr.bf16.mxu0 0
    %385 = vmatpush1.bf16.msra.mxu0 0
    %386 = vmatprep.subr.bf16.mxu0 0
    %387 = vmatpush1.bf16.msra.mxu0 0
    %388 = vmatprep.subr.bf16.mxu0 0
    %389 = vmatpush1.bf16.msra.mxu0 0
    %390 = vmatprep.subr.bf16.mxu0 0
    %391 = vmatpush1.bf16.msra.mxu0 0
    %392 = vmatprep.subr.bf16.mxu0 %v89
    %393 = vmatpush1.bf16.msra.mxu0 %v88
    %394 = vmatprep.subr.bf16.mxu0 0
    %395 = vmatpush2.bf16.msra.mxu0 0
    %396 = vmatprep.subr.bf16.mxu0 0
    %397 = vmatpush2.bf16.msra.mxu0 0
    %398 = vmatprep.subr.bf16.mxu0 0
    %399 = vmatpush2.bf16.msra.mxu0 0
    %400 = vmatprep.subr.bf16.mxu0 0
    %401 = vmatpush2.bf16.msra.mxu0 0
    %402 = vmatprep.subr.bf16.mxu0 0
    %403 = vmatpush2.bf16.msra.mxu0 0
    %404 = vmatprep.subr.bf16.mxu0 0
    %405 = vmatpush2.bf16.msra.mxu0 0
    %406 = vmatprep.subr.bf16.mxu0 0
    %407 = vmatpush2.bf16.msra.mxu0 0
    %408 = vmatprep.subr.bf16.mxu0 0
    %409 = vmatpush2.bf16.msra.mxu0 0
    %410 = vmatprep.mubr.bf16.mxu0 0
    %411 = vmatmul.mubr.bf16.gmra.mxu0 %v376
    %v412 = vpop.f32.mrf.mxu0
    %v413 = vadd.f32 0.0, %v412
    %v414 = vpop.f32.mrf.mxu0
    %v415 = vadd.f32 0.0, %v414
    %v416 = vpop.f32.mrf.mxu0
    %v417 = vpop.f32.mrf.mxu0
    %418 = vdwg.mxu0
    %v420 = vsel %vm247, %v55, 0
    %422 = vmatprep.subr.bf16.mxu0 0
    %423 = vmatpush1.bf16.msra.mxu0 0
    %424 = vmatprep.subr.bf16.mxu0 0
    %425 = vmatpush1.bf16.msra.mxu0 0
    %426 = vmatprep.subr.bf16.mxu0 0
    %427 = vmatpush1.bf16.msra.mxu0 0
    %428 = vmatprep.subr.bf16.mxu0 0
    %429 = vmatpush1.bf16.msra.mxu0 0
    %430 = vmatprep.subr.bf16.mxu0 0
    %431 = vmatpush1.bf16.msra.mxu0 0
    %432 = vmatprep.subr.bf16.mxu0 0
    %433 = vmatpush1.bf16.msra.mxu0 0
    %434 = vmatprep.subr.bf16.mxu0 %v374
    %435 = vmatpush1.bf16.msra.mxu0 %v373
    %436 = vmatprep.subr.bf16.mxu0 %v372
    %437 = vmatpush1.bf16.msra.mxu0 %v371
    %438 = vmatprep.subr.bf16.mxu0 0
    %439 = vmatpush2.bf16.msra.mxu0 0
    %440 = vmatprep.subr.bf16.mxu0 0
    %441 = vmatpush2.bf16.msra.mxu0 0
    %442 = vmatprep.subr.bf16.mxu0 0
    %443 = vmatpush2.bf16.msra.mxu0 0
    %444 = vmatprep.subr.bf16.mxu0 0
    %445 = vmatpush2.bf16.msra.mxu0 0
    %446 = vmatprep.subr.bf16.mxu0 0
    %447 = vmatpush2.bf16.msra.mxu0 0
    %448 = vmatprep.subr.bf16.mxu0 0
    %449 = vmatpush2.bf16.msra.mxu0 0
    %450 = vmatprep.subr.bf16.mxu0 0
    %451 = vmatpush2.bf16.msra.mxu0 0
    %452 = vmatprep.subr.bf16.mxu0 0
    %453 = vmatpush2.bf16.msra.mxu0 0
    %454 = vmatprep.mubr.bf16.mxu0 0
    %455 = vmatmul.mubr.bf16.gmra.mxu0 %v420
    %v456 = vpop.f32.mrf.mxu0
    %v457 = vadd.f32 %v413, %v456
    %v458 = vpop.f32.mrf.mxu0
    %v459 = vadd.f32 %v415, %v458
    %v460 = vpop.f32.mrf.mxu0
    %v461 = vpop.f32.mrf.mxu0
    %462 = vdwg.mxu0
    %v463 = vld [vmem:[%s8] sm:$0xff]
    %465 = vset.pattern.permute.xlu0 0
    %466 = vperm.xlu0 %465, %v463
    %v467 = vpop.permute.xlu0 %466
    %v469 = vadd.f32 %v457, %v467
    %v470 = vadd.f32 %v459, %v467
    %v471 = vrot.slane %v469, 4
    %v472 = vmax.f32 %v469, %v471
    %v473 = vrot.slane %v472, 2
    %v474 = vmax.f32 %v472, %v473
    %v475 = vrot.slane %v474, 1
    %v476 = vmax.f32 %v474, %v475
    %v477 = vrot.slane %v470, 4
    %v478 = vmax.f32 %v470, %v477
    %v479 = vrot.slane %v478, 2
    %v480 = vmax.f32 %v478, %v479
    %v481 = vrot.slane %v480, 1
    %v482 = vmax.f32 %v480, %v481
    %v483 = vsub.f32 %v469, %v476
    %v484 = vsub.f32 %v470, %v482
    %v485 = vmul.f32 %v483, 1.442695
    %v486 = vpow.pop %v485
    %v487 = vmul.f32 %v484, 1.442695
    %v488 = vpow.pop %v487
    %v489 = vrot.slane %v486, 4
    %v490 = vadd.f32 %v486, %v489
    %v491 = vrot.slane %v490, 2
    %v492 = vadd.f32 %v490, %v491
    %v493 = vrot.slane %v492, 1
    %v494 = vadd.f32 %v492, %v493
    %v495 = vrot.slane %v488, 4
    %v496 = vadd.f32 %v488, %v495
    %v497 = vrot.slane %v496, 2
    %v498 = vadd.f32 %v496, %v497
    %v499 = vrot.slane %v498, 1
    %v500 = vadd.f32 %v498, %v499
    %v501 = vlog2.pop %v494
    %v502 = vmul.f32 %v501, 0.6931472
    %v503 = vlog2.pop %v500
    %v504 = vmul.f32 %v503, 0.6931472
    %v505 = vsub.f32 %v483, %v502
    %v506 = vsub.f32 %v484, %v504
    %507 = vst [vmem:[#allocation2] sm:$0xff] %v505
    %508 = vst [vmem:[#allocation2 + $0x8] sm:$0xff] %v506
    // Predicated region
    $region38: #{bayesian_network_forward.1} parent=1 // pred_check
      _
    $region39: #{bayesian_network_forward.1} parent=1 // pred_check_branch
      %510 = sbr.rel (0) target = $region41
    $region40: #{bayesian_network_forward.1} parent=1 // pred_region
      %s512 = ssub.s32 256, 256
      %513 = vsyncadd [#allocation3], %s512
      %s515 = sshll.u32 [#allocation2], 4
      %s516 = int_to_ptr.vmem [resolvable:$true] %s515
      %518 = dma.vmem_to_hbm [thread:$0]  %s516, 256, %s9, [#allocation3]
    $region41: #{bayesian_network_forward.1} parent=1 // pred_fallthru
      _
    // Predicated region
    $region42: #{bayesian_network_forward.1} parent=1 // pred_check
      _
    $region43: #{bayesian_network_forward.1} parent=1 // pred_check_branch
      %520 = sbr.rel (0) target = $region45
    $region44: #{bayesian_network_forward.1} parent=1 // pred_region
      %521 = dma.done [#allocation3], 256
    $region45: #{bayesian_network_forward.1} parent=1 // pred_fallthru
      _
    %522 = vsyncpa [#allocation3], 1

</llo_original>
